<compile_context>
chip_gen: v7x
topology: tpu7x:2x2x1
jax: 0.10.0
libtpu: 0.0.40
codegen_flags: <defaults>
</compile_context>

<pallas_src>
import functools
import math

import jax
import jax.numpy as jnp
from jax.experimental import pallas as pl
from jax.experimental.pallas import tpu as pltpu


def _hyper_kernel(h_ref, wh_ref, bias_ref, we_big_ref, be_t_ref,
                  w_out_ref, b_out_ref, *, imid):
    # h_ref:      (TB, P)
    # wh_ref:     (P, IMID+OUT)   [fc_w_param.weight.T | fc_b_param.weight.T]
    # bias_ref:   (1, IMID+OUT)   param biases + one-hot index path, pre-summed
    # we_big_ref: (IMID, OUT*IN)  block-diagonal expansion of fc_w_embed.weight
    #                             emitting the transposed (out, in) layout
    # be_t_ref:   (1, OUT*IN)     fc_w_embed.bias tiled per in-channel
    # w_out_ref:  (TB, OUT*IN)    lane-dense, already swapaxes(-2,-1)'d
    # b_out_ref:  (TB, OUT)
    h = h_ref[...]
    zc = (jnp.dot(h, wh_ref[...], preferred_element_type=jnp.float32)
          + bias_ref[...])                                  # (TB, IMID+OUT)
    z = zc[:, :imid]                                        # (TB, IMID)
    w_out_ref[...] = (
        jnp.dot(z, we_big_ref[...], preferred_element_type=jnp.float32)
        + be_t_ref[...]
    )
    b_out_ref[...] = zc[:, imid:]


def hyper_linear_embedder(h, index, params, *, in_channels, out_channels,
                          mid_channels, block_b=1024):
    """Forward pass of HyperLinearEmbedder. Returns (w, b) like the module."""
    batch_shape = h.shape[:-1]
    n_params = h.shape[-1]
    B = int(math.prod(batch_shape)) if batch_shape else 1
    imid = in_channels * mid_channels
    oi = out_channels * in_channels

    h2 = h.reshape(B, n_params).astype(jnp.float32)
    idx = index.reshape(-1).astype(jnp.float32)

    # ---- B-independent precompute (wrapper glue; constant-folded under jit) ----
    # h path: one concatenated weight matrix.
    wh = jnp.concatenate(
        [params["fc_w_param_w"].T, params["fc_b_param_w"].T], axis=1
    )                                                       # (P, IMID+OUT)
    # One-hot index path folded into effective biases (tiny gather in XLA).
    bias_w = (params["fc_w_param_b"]
              + idx @ params["fc_w_index_w"].T + params["fc_w_index_b"])
    bias_b = (params["fc_b_param_b"]
              + idx @ params["fc_b_index_w"].T + params["fc_b_index_b"])
    bias_eff = jnp.concatenate([bias_w, bias_b]).reshape(1, imid + out_channels)
    # fc_w_embed as a block-diagonal matrix whose output is already in the
    # swapped (out, in) layout: we_big[i*MID+m, o*IN+j] = we[o, m] * (i == j).
    we = params["fc_w_embed_w"]                             # (OUT, MID)
    eye_in = jnp.eye(in_channels, dtype=jnp.float32)
    we_big = jnp.einsum("om,ij->imoj", we, eye_in).reshape(imid, oi)
    be_t = jnp.repeat(params["fc_w_embed_b"], in_channels).reshape(1, oi)

    kernel = functools.partial(_hyper_kernel, imid=imid)
    out_shape = (jax.ShapeDtypeStruct((B, oi), jnp.float32),
                 jax.ShapeDtypeStruct((B, out_channels), jnp.float32))
    inputs = (h2, wh, bias_eff, we_big, be_t)

    if B <= block_b:
        # Single grid-less invocation: whole (tiny) operands in VMEM, no
        # per-grid-step pipeline overhead.
        w_flat, b2 = pl.pallas_call(kernel, out_shape=out_shape)(*inputs)
    else:
        # Tile the flattened batch; weights stay resident, h / outputs are
        # double-buffered.  "parallel" lets v7x shard over both TensorCores.
        block_b = max(8, (block_b // 8) * 8)                # sublane alignment
        nb = pl.cdiv(B, block_b)

        def resident(a):
            return pl.BlockSpec(a.shape, lambda i: (0,) * a.ndim)

        w_flat, b2 = pl.pallas_call(
            kernel,
            grid=(nb,),
            in_specs=[
                pl.BlockSpec((block_b, n_params), lambda i: (i, 0)),
                resident(wh),
                resident(bias_eff),
                resident(we_big),
                resident(be_t),
            ],
            out_specs=(
                pl.BlockSpec((block_b, oi), lambda i: (i, 0)),
                pl.BlockSpec((block_b, out_channels), lambda i: (i, 0)),
            ),
            out_shape=out_shape,
            compiler_params=pltpu.CompilerParams(
                dimension_semantics=("parallel",)),
        )(*inputs)

    # Free row-major views: w_flat[b, o*IN + i] == w[b, o, i].
    w = w_flat.reshape(*batch_shape, out_channels, in_channels)
    b = b2.reshape(*batch_shape, out_channels)
    return w, b


def init_params(key, n_params, n_layers, out_channels, in_channels,
                mid_channels):
    """Deterministic synthetic init mimicking the module's __init__ shapes.

    Weights: xavier_normal_(gain=2e-6); biases: nn.Linear default uniform.
    """
    def xavier_normal(k, shape, gain):
        fan_out, fan_in = shape
        std = gain * math.sqrt(2.0 / (fan_in + fan_out))
        return std * jax.random.normal(k, shape, dtype=jnp.float32)

    def linear_bias(k, fan_in, out_feats):
        bound = 1.0 / math.sqrt(fan_in)
        return jax.random.uniform(k, (out_feats,), jnp.float32, -bound, bound)

    keys = jax.random.split(key, 10)
    gain = 2e-6
    mi = mid_channels * in_channels
    return {
        "fc_w_param_w": xavier_normal(keys[0], (mi, n_params), gain),
        "fc_w_param_b": linear_bias(keys[1], n_params, mi),
        "fc_w_index_w": xavier_normal(keys[2], (mi, n_layers), gain),
        "fc_w_index_b": linear_bias(keys[3], n_layers, mi),
        "fc_w_embed_w": xavier_normal(keys[4], (out_channels, mid_channels), gain),
        "fc_w_embed_b": linear_bias(keys[5], mid_channels, out_channels),
        "fc_b_param_w": xavier_normal(keys[6], (out_channels, n_params), gain),
        "fc_b_param_b": linear_bias(keys[7], n_params, out_channels),
        "fc_b_index_w": xavier_normal(keys[8], (out_channels, n_layers), gain),
        "fc_b_index_b": linear_bias(keys[9], n_layers, out_channels),
    }


def reference_forward(h, index, params, *, in_channels, out_channels,
                      mid_channels):
    """Pure-JAX reference mirroring the PyTorch forward exactly."""
    w = (h @ params["fc_w_param_w"].T + params["fc_w_param_b"]
         + index @ params["fc_w_index_w"].T + params["fc_w_index_b"])
    w = w.reshape(*h.shape[:-1], in_channels, mid_channels)
    w = w @ params["fc_w_embed_w"].T + params["fc_w_embed_b"]
    w = jnp.swapaxes(w, -2, -1)
    b = (h @ params["fc_b_param_w"].T + params["fc_b_param_b"]
         + index @ params["fc_b_index_w"].T + params["fc_b_index_b"])
    return w, b


if __name__ == "__main__":
    # Small shapes consistent with the module.
    n_params = 8
    n_layers = 4
    out_channels, in_channels = 16, 8      # dim_w = (16, 8), dim_b = (16,)
    mid_channels = 32

    key = jax.random.PRNGKey(0)
    k_h, k_p, k_h2 = jax.random.split(key, 3)
    params = init_params(k_p, n_params, n_layers, out_channels, in_channels,
                         mid_channels)

    # --- case 1: tiny batch, grid-less fast path ---
    h = jax.random.normal(k_h, (2, n_params), dtype=jnp.float32)
    index = jnp.zeros((n_layers,), jnp.float32).at[1].set(1.0)  # one-hot

    w, b = hyper_linear_embedder(
        h, index, params,
        in_channels=in_channels, out_channels=out_channels,
        mid_channels=mid_channels,
    )
    jax.block_until_ready((w, b))
    assert w.shape == (2, out_channels, in_channels)
    assert b.shape == (2, out_channels)

    w_ref, b_ref = reference_forward(
        h, index, params,
        in_channels=in_channels, out_channels=out_channels,
        mid_channels=mid_channels,
    )
    assert jnp.allclose(w, w_ref, atol=1e-5, rtol=1e-5)
    assert jnp.allclose(b, b_ref, atol=1e-5, rtol=1e-5)

    # --- case 2: larger flattened batch, exercises the B-tiled parallel grid ---
    h_big = jax.random.normal(k_h2, (4, 8, n_params), dtype=jnp.float32)
    index2 = jnp.zeros((n_layers,), jnp.float32).at[2].set(1.0)

    w2, b2 = hyper_linear_embedder(
        h_big, index2, params,
        in_channels=in_channels, out_channels=out_channels,
        mid_channels=mid_channels, block_b=8,
    )
    jax.block_until_ready((w2, b2))
    assert w2.shape == (4, 8, out_channels, in_channels)
    assert b2.shape == (4, 8, out_channels)

    w2_ref, b2_ref = reference_forward(
        h_big, index2, params,
        in_channels=in_channels, out_channels=out_channels,
        mid_channels=mid_channels,
    )
    assert jnp.allclose(w2, w2_ref, atol=1e-5, rtol=1e-5)
    assert jnp.allclose(b2, b2_ref, atol=1e-5, rtol=1e-5)

    print("KERNEL_OK")
</pallas_src>

<mosaic_0001>
module attributes {stable_mosaic.version = 11 : i64} {
  func.func @_hyper_kernel(%arg0: memref<2x8xf32, #tpu.memory_space<vmem>>, %arg1: memref<8x272xf32, #tpu.memory_space<vmem>>, %arg2: memref<1x272xf32, #tpu.memory_space<vmem>>, %arg3: memref<256x128xf32, #tpu.memory_space<vmem>>, %arg4: memref<1x128xf32, #tpu.memory_space<vmem>>, %arg5: memref<2x128xf32, #tpu.memory_space<vmem>>, %arg6: memref<2x16xf32, #tpu.memory_space<vmem>>) attributes {dimension_semantics = [], scalar_prefetch = 0 : i64, scratch_operands = 0 : i64, tpu.core_type = #tpu.core_type<tc>} {
    %c0 = arith.constant 0 : index
    %c0_0 = arith.constant 0 : index
    %0 = vector.load %arg0[%c0, %c0_0] : memref<2x8xf32, #tpu.memory_space<vmem>>, vector<2x8xf32>
    %c0_1 = arith.constant 0 : index
    %c0_2 = arith.constant 0 : index
    %1 = vector.load %arg1[%c0_1, %c0_2] : memref<8x272xf32, #tpu.memory_space<vmem>>, vector<8x272xf32>
    %cst = arith.constant dense<0.000000e+00> : vector<2x272xf32>
    %2 = tpu.matmul %0, %1, %cst {dimension_numbers = #tpu.dot_dimension_numbers<[1], [0], [0], [1], [0, 0, 1, 1], [], []>} : vector<2x8xf32>, vector<8x272xf32>, vector<2x272xf32> -> vector<2x272xf32>
    %c0_3 = arith.constant 0 : index
    %c0_4 = arith.constant 0 : index
    %3 = vector.load %arg2[%c0_3, %c0_4] : memref<1x272xf32, #tpu.memory_space<vmem>>, vector<1x272xf32>
    %4 = vector.broadcast %3 : vector<1x272xf32> to vector<2x272xf32>
    %5 = arith.addf %2, %4 : vector<2x272xf32>
    %6 = vector.extract_strided_slice %5 {offsets = [0, 0], sizes = [2, 256], strides = [1, 1]} : vector<2x272xf32> to vector<2x256xf32>
    %c0_5 = arith.constant 0 : index
    %c0_6 = arith.constant 0 : index
    %7 = vector.load %arg3[%c0_5, %c0_6] : memref<256x128xf32, #tpu.memory_space<vmem>>, vector<256x128xf32>
    %cst_7 = arith.constant dense<0.000000e+00> : vector<2x128xf32>
    %8 = tpu.matmul %6, %7, %cst_7 {dimension_numbers = #tpu.dot_dimension_numbers<[1], [0], [0], [1], [0, 0, 1, 1], [], []>} : vector<2x256xf32>, vector<256x128xf32>, vector<2x128xf32> -> vector<2x128xf32>
    %c0_8 = arith.constant 0 : index
    %c0_9 = arith.constant 0 : index
    %9 = vector.load %arg4[%c0_8, %c0_9] : memref<1x128xf32, #tpu.memory_space<vmem>>, vector<1x128xf32>
    %10 = vector.broadcast %9 : vector<1x128xf32> to vector<2x128xf32>
    %11 = arith.addf %8, %10 : vector<2x128xf32>
    %c0_10 = arith.constant 0 : index
    %c0_11 = arith.constant 0 : index
    %12 = vector.load %arg5[%c0_10, %c0_11] : memref<2x128xf32, #tpu.memory_space<vmem>>, vector<2x128xf32>
    tpu.vector_store %arg5[%c0_10, %c0_11], %11 {strides = array<i32>} : memref<2x128xf32, #tpu.memory_space<vmem>>, vector<2x128xf32>,
    %13 = vector.extract_strided_slice %5 {offsets = [0, 256], sizes = [2, 16], strides = [1, 1]} : vector<2x272xf32> to vector<2x16xf32>
    %c0_12 = arith.constant 0 : index
    %c0_13 = arith.constant 0 : index
    %14 = vector.load %arg6[%c0_12, %c0_13] : memref<2x16xf32, #tpu.memory_space<vmem>>, vector<2x16xf32>
    tpu.vector_store %arg6[%c0_12, %c0_13], %13 {strides = array<i32>} : memref<2x16xf32, #tpu.memory_space<vmem>>, vector<2x16xf32>,
    return
  }
}

</mosaic_0001>

<llo_original>
// kernel: tpu_custom_call.1
$region0: #{tpu_custom_call.1}
  #allocation0 [shape = 'u32[]', space=smem, size = 0x4, offset = 0x4, fixed_abs, tag = 'smem constant byte address 0x4 - core index']
  #allocation1 [shape = 'u32[144,128]{1,0:T(1,128)}', space=vmem, size = 0x12000, scoped, tag = 'internal scratch']
  %s0 = inlined_call_operand.hbm [shape: f32[2,8], index: 0, kind: input, shape index: {}]
  %s1 = inlined_call_operand.hbm [shape: f32[8,272], index: 1, kind: input, shape index: {}]
  %s2 = inlined_call_operand.vmem [shape: f32[1,272], index: 2, kind: input, shape index: {}]
  %s3 = inlined_call_operand.hbm [shape: f32[256,128], index: 3, kind: input, shape index: {}]
  %s4 = inlined_call_operand.vmem [shape: f32[1,128], index: 4, kind: input, shape index: {}]
  %s5 = inlined_call_operand.hbm [shape: f32[2,128], index: 5, kind: output, shape index: {0}]
  %s6 = inlined_call_operand.hbm [shape: f32[2,16], index: 6, kind: output, shape index: {1}]
  %7 = xla_tuple %s5, %s6
  %s8 = sld [smem:[#allocation0]]
  $region50: #{tpu_custom_call.1} parent=0
    _
  %s10 = ssub.s32 1, %s8
  %s11 = scalar_select 0, %s10, %s8
  $region1: #{tpu_custom_call.1} parent=0
    #allocation2 [shape = 'u8[1024]{0}', space=vmem, size = 0x400, scoped, tag = 'input window, operand 0, single buffered']
    #allocation3 [shape = 's32[1]{0}', space=sflag, size = 0x4, scoped, tag = 'scoped memory for tpu_custom_call.1']
    #allocation4 [shape = 's32[1]{0}', space=sflag, size = 0x4, scoped, tag = 'scoped memory for tpu_custom_call.1']
    #allocation5 [shape = 'u8[12288]{0}', space=vmem, size = 0x3000, scoped, tag = 'input window, operand 1, single buffered']
    #allocation6 [shape = 's32[1]{0}', space=sflag, size = 0x4, scoped, tag = 'scoped memory for tpu_custom_call.1']
    #allocation7 [shape = 'u8[131072]{0}', space=vmem, size = 0x20000, scoped, tag = 'input window, operand 3, single buffered']
    #allocation8 [shape = 'u8[1024]{0}', space=vmem, size = 0x400, scoped, tag = 'output window, operand 0, single buffered']
    #allocation9 [shape = 'u8[1024]{0}', space=vmem, size = 0x400, scoped, tag = 'output window, operand 1, single buffered']
    #allocation10 [shape = 's32[1]{0}', space=sflag, size = 0x4, scoped, tag = 'scoped memory for tpu_custom_call.1']
    %12 = vsyncpa [#allocation3], 0
    %13 = vsyncpa [#allocation6], 0
    %14 = vsyncpa [#allocation4], 0
    %15 = vsyncpa [#allocation10], 0
    // Predicated region
    $region2: #{tpu_custom_call.1} parent=1 // pred_check
      _
    $region3: #{tpu_custom_call.1} parent=1 // pred_check_branch
      %17 = sbr.rel (0) target = $region5
    $region4: #{tpu_custom_call.1} parent=1 // pred_region
      %s19 = ssub.s32 32, 32
      %20 = vsyncadd [#allocation3], %s19
      %s22 = sshll.u32 [#allocation2], 4
      %s23 = int_to_ptr.vmem [resolvable:$true] %s22
      %25 = dma.hbm_to_vmem [thread:$0]  %s0, 32, %s23, [#allocation3]
    $region5: #{tpu_custom_call.1} parent=1 // pred_fallthru
      _
    // Predicated region
    $region6: #{tpu_custom_call.1} parent=1 // pred_check
      _
    $region7: #{tpu_custom_call.1} parent=1 // pred_check_branch
      %27 = sbr.rel (0) target = $region9
    $region8: #{tpu_custom_call.1} parent=1 // pred_region
      %s29 = ssub.s32 384, 384
      %30 = vsyncadd [#allocation6], %s29
      %s32 = sshll.u32 [#allocation5], 4
      %s33 = int_to_ptr.vmem [resolvable:$true] %s32
      %35 = dma.hbm_to_vmem [thread:$0]  %s1, 384, %s33, [#allocation6]
    $region9: #{tpu_custom_call.1} parent=1 // pred_fallthru
      _
    // Predicated region
    $region10: #{tpu_custom_call.1} parent=1 // pred_check
      _
    $region11: #{tpu_custom_call.1} parent=1 // pred_check_branch
      %37 = sbr.rel (0) target = $region13
    $region12: #{tpu_custom_call.1} parent=1 // pred_region
      _
    $region13: #{tpu_custom_call.1} parent=1 // pred_fallthru
      _
    // Predicated region
    $region14: #{tpu_custom_call.1} parent=1 // pred_check
      _
    $region15: #{tpu_custom_call.1} parent=1 // pred_check_branch
      %39 = sbr.rel (0) target = $region17
    $region16: #{tpu_custom_call.1} parent=1 // pred_region
      %s41 = ssub.s32 4096, 4096
      %42 = vsyncadd [#allocation6], %s41
      %s43 = sshll.u32 [#allocation7], 4
      %s44 = int_to_ptr.vmem [resolvable:$true] %s43
      %49 = dma.hbm_to_vmem [thread:$0]  %s3, 4096, %s44, [#allocation6], 128, 128, 8
    $region17: #{tpu_custom_call.1} parent=1 // pred_fallthru
      _
    // Predicated region
    $region18: #{tpu_custom_call.1} parent=1 // pred_check
      _
    $region19: #{tpu_custom_call.1} parent=1 // pred_check_branch
      %51 = sbr.rel (0) target = $region21
    $region20: #{tpu_custom_call.1} parent=1 // pred_region
      _
    $region21: #{tpu_custom_call.1} parent=1 // pred_fallthru
      _
    // Predicated region
    $region22: #{tpu_custom_call.1} parent=1 // pred_check
      _
    $region23: #{tpu_custom_call.1} parent=1 // pred_check_branch
      %53 = sbr.rel (0) target = $region25
    $region24: #{tpu_custom_call.1} parent=1 // pred_region
      %54 = dma.done [#allocation3], 32
    $region25: #{tpu_custom_call.1} parent=1 // pred_fallthru
      _
    // Predicated region
    $region26: #{tpu_custom_call.1} parent=1 // pred_check
      _
    $region27: #{tpu_custom_call.1} parent=1 // pred_check_branch
      %56 = sbr.rel (0) target = $region29
    $region28: #{tpu_custom_call.1} parent=1 // pred_region
      %57 = dma.done [#allocation6], 384
    $region29: #{tpu_custom_call.1} parent=1 // pred_fallthru
      _
    // Predicated region
    $region30: #{tpu_custom_call.1} parent=1 // pred_check
      _
    $region31: #{tpu_custom_call.1} parent=1 // pred_check_branch
      %59 = sbr.rel (0) target = $region33
    $region32: #{tpu_custom_call.1} parent=1 // pred_region
      %60 = dma.done [#allocation6], 4096
    $region33: #{tpu_custom_call.1} parent=1 // pred_fallthru
      _
    %v61 = vld [vmem:[#allocation2] sm:$0x3]
    %v62 = vld [vmem:[#allocation5] sm:$0xff]
    %v63 = vld [vmem:[#allocation5 + $0x8] sm:$0xff]
    %v64 = vld [vmem:[#allocation5 + $0x10] sm:$0xff]
    %v65 = vld [vmem:[%s2] sm:$0x7]
    %v67 = vlaneseq
    %v68 = vshrl.u32 %v67, 7
    %v69 = vsub.s32 0, %v68
    %v70 = vrot.slane %v65, %v69
    %v71 = vlaneseq
    %v72 = vshrl.u32 %v71, 7
    %v73 = vsub.s32 1, %v72
    %v74 = vrot.slane %v65, %v73
    %v75 = vlaneseq
    %v76 = vshrl.u32 %v75, 7
    %v77 = vsub.s32 2, %v76
    %v78 = vrot.slane %v65, %v77
    %vm82 = vcmask 64512
    %v84 = vsel %vm82, %v61, 0
    %86 = vmatprep.subr.mxu0 %v63
    %87 = vmatpush1.msra.mxu0 %v62
    %88 = vmatprep.subr.mxu0 0.0
    %89 = vmatpush1.msra.mxu0 0.0
    %90 = vmatprep.subr.mxu0 0.0
    %91 = vmatpush1.msra.mxu0 0.0
    %92 = vmatprep.subr.mxu0 0.0
    %93 = vmatpush1.msra.mxu0 0.0
    %94 = vmatprep.subr.mxu0 0.0
    %95 = vmatpush1.msra.mxu0 0.0
    %96 = vmatprep.subr.mxu0 0.0
    %97 = vmatpush1.msra.mxu0 0.0
    %98 = vmatprep.subr.mxu0 0.0
    %99 = vmatpush1.msra.mxu0 0.0
    %100 = vmatprep.subr.mxu0 0.0
    %101 = vmatpush1.msra.mxu0 0.0
    %102 = vmatprep.subr.mxu0 0.0
    %103 = vmatpush1.msra.mxu0 0.0
    %104 = vmatprep.subr.mxu0 0.0
    %105 = vmatpush1.msra.mxu0 0.0
    %106 = vmatprep.subr.mxu0 0.0
    %107 = vmatpush1.msra.mxu0 0.0
    %108 = vmatprep.subr.mxu0 0.0
    %109 = vmatpush1.msra.mxu0 0.0
    %110 = vmatprep.subr.mxu0 0.0
    %111 = vmatpush1.msra.mxu0 0.0
    %112 = vmatprep.subr.mxu0 0.0
    %113 = vmatpush1.msra.mxu0 0.0
    %114 = vmatprep.subr.mxu0 0.0
    %115 = vmatpush1.msra.mxu0 0.0
    %116 = vmatprep.subr.mxu0 0.0
    %117 = vmatpush1.msra.mxu0 0.0
    %118 = vmatprep.subr.mxu0 0.0
    %119 = vmatpush1.msra.mxu0 0.0
    %120 = vmatprep.subr.mxu0 0.0
    %121 = vmatpush1.msra.mxu0 0.0
    %122 = vmatprep.subr.mxu0 0.0
    %123 = vmatpush1.msra.mxu0 0.0
    %124 = vmatprep.subr.mxu0 0.0
    %125 = vmatpush1.msra.mxu0 0.0
    %126 = vmatprep.subr.mxu0 0.0
    %127 = vmatpush1.msra.mxu0 0.0
    %128 = vmatprep.subr.mxu0 0.0
    %129 = vmatpush1.msra.mxu0 0.0
    %130 = vmatprep.subr.mxu0 0.0
    %131 = vmatpush1.msra.mxu0 0.0
    %132 = vmatprep.subr.mxu0 0.0
    %133 = vmatpush1.msra.mxu0 0.0
    %134 = vmatprep.subr.mxu0 0.0
    %135 = vmatpush1.msra.mxu0 0.0
    %136 = vmatprep.subr.mxu0 0.0
    %137 = vmatpush1.msra.mxu0 0.0
    %138 = vmatprep.subr.mxu0 0.0
    %139 = vmatpush1.msra.mxu0 0.0
    %140 = vmatprep.subr.mxu0 0.0
    %141 = vmatpush1.msra.mxu0 0.0
    %142 = vmatprep.subr.mxu0 0.0
    %143 = vmatpush1.msra.mxu0 0.0
    %144 = vmatprep.subr.mxu0 0.0
    %145 = vmatpush1.msra.mxu0 0.0
    %146 = vmatprep.subr.mxu0 0.0
    %147 = vmatpush1.msra.mxu0 0.0
    %148 = vmatprep.subr.mxu0 0.0
    %149 = vmatpush1.msra.mxu0 0.0
    %150 = vmatprep.mubr.f32.mxu0 0.0
    %151 = vmatmul.mubr.f32.gmra.mrb[0].mxu0 %v84
    %v152 = vpop.f32.mrb[0].mxu0
    %v153 = vadd.f32 %v70, %v152
    %v154 = vpop.f32.mrb[0].mxu0
    %v155 = vadd.f32 %v74, %v154
    %156 = vdwg.mxu0
    %157 = vmatprep.subr.mxu0 0.0
    %158 = vmatpush1.msra.mxu0 %v64
    %159 = vmatprep.subr.mxu0 0.0
    %160 = vmatpush1.msra.mxu0 0.0
    %161 = vmatprep.subr.mxu0 0.0
    %162 = vmatpush1.msra.mxu0 0.0
    %163 = vmatprep.subr.mxu0 0.0
    %164 = vmatpush1.msra.mxu0 0.0
    %165 = vmatprep.subr.mxu0 0.0
    %166 = vmatpush1.msra.mxu0 0.0
    %167 = vmatprep.subr.mxu0 0.0
    %168 = vmatpush1.msra.mxu0 0.0
    %169 = vmatprep.subr.mxu0 0.0
    %170 = vmatpush1.msra.mxu0 0.0
    %171 = vmatprep.subr.mxu0 0.0
    %172 = vmatpush1.msra.mxu0 0.0
    %173 = vmatprep.subr.mxu0 0.0
    %174 = vmatpush1.msra.mxu0 0.0
    %175 = vmatprep.subr.mxu0 0.0
    %176 = vmatpush1.msra.mxu0 0.0
    %177 = vmatprep.subr.mxu0 0.0
    %178 = vmatpush1.msra.mxu0 0.0
    %179 = vmatprep.subr.mxu0 0.0
    %180 = vmatpush1.msra.mxu0 0.0
    %181 = vmatprep.subr.mxu0 0.0
    %182 = vmatpush1.msra.mxu0 0.0
    %183 = vmatprep.subr.mxu0 0.0
    %184 = vmatpush1.msra.mxu0 0.0
    %185 = vmatprep.subr.mxu0 0.0
    %186 = vmatpush1.msra.mxu0 0.0
    %187 = vmatprep.subr.mxu0 0.0
    %188 = vmatpush1.msra.mxu0 0.0
    %189 = vmatprep.subr.mxu0 0.0
    %190 = vmatpush1.msra.mxu0 0.0
    %191 = vmatprep.subr.mxu0 0.0
    %192 = vmatpush1.msra.mxu0 0.0
    %193 = vmatprep.subr.mxu0 0.0
    %194 = vmatpush1.msra.mxu0 0.0
    %195 = vmatprep.subr.mxu0 0.0
    %196 = vmatpush1.msra.mxu0 0.0
    %197 = vmatprep.subr.mxu0 0.0
    %198 = vmatpush1.msra.mxu0 0.0
    %199 = vmatprep.subr.mxu0 0.0
    %200 = vmatpush1.msra.mxu0 0.0
    %201 = vmatprep.subr.mxu0 0.0
    %202 = vmatpush1.msra.mxu0 0.0
    %203 = vmatprep.subr.mxu0 0.0
    %204 = vmatpush1.msra.mxu0 0.0
    %205 = vmatprep.subr.mxu0 0.0
    %206 = vmatpush1.msra.mxu0 0.0
    %207 = vmatprep.subr.mxu0 0.0
    %208 = vmatpush1.msra.mxu0 0.0
    %209 = vmatprep.subr.mxu0 0.0
    %210 = vmatpush1.msra.mxu0 0.0
    %211 = vmatprep.subr.mxu0 0.0
    %212 = vmatpush1.msra.mxu0 0.0
    %213 = vmatprep.subr.mxu0 0.0
    %214 = vmatpush1.msra.mxu0 0.0
    %215 = vmatprep.subr.mxu0 0.0
    %216 = vmatpush1.msra.mxu0 0.0
    %217 = vmatprep.subr.mxu0 0.0
    %218 = vmatpush1.msra.mxu0 0.0
    %219 = vmatprep.subr.mxu0 0.0
    %220 = vmatpush1.msra.mxu0 0.0
    %221 = vmatprep.mubr.f32.mxu0 0.0
    %222 = vmatmul.mubr.f32.gmra.mrb[0].mxu0 %v84
    %v223 = vpop.f32.mrb[0].mxu0
    %v224 = vadd.f32 %v78, %v223
    %v225 = vpop.f32.mrb[0].mxu0
    %226 = vdwg.mxu0
    %v227 = vld [vmem:[#allocation7] sm:$0xff]
    %v228 = vld [vmem:[#allocation7 + $0x8] sm:$0xff]
    %v229 = vld [vmem:[#allocation7 + $0x10] sm:$0xff]
    %v230 = vld [vmem:[#allocation7 + $0x18] sm:$0xff]
    %v231 = vld [vmem:[#allocation7 + $0x20] sm:$0xff]
    %v232 = vld [vmem:[#allocation7 + $0x28] sm:$0xff]
    %v233 = vld [vmem:[#allocation7 + $0x30] sm:$0xff]
    %v234 = vld [vmem:[#allocation7 + $0x38] sm:$0xff]
    %v235 = vld [vmem:[#allocation7 + $0x40] sm:$0xff]
    %v236 = vld [vmem:[#allocation7 + $0x48] sm:$0xff]
    %v237 = vld [vmem:[#allocation7 + $0x50] sm:$0xff]
    %v238 = vld [vmem:[#allocation7 + $0x58] sm:$0xff]
    %v239 = vld [vmem:[#allocation7 + $0x60] sm:$0xff]
    %v240 = vld [vmem:[#allocation7 + $0x68] sm:$0xff]
    %v241 = vld [vmem:[#allocation7 + $0x70] sm:$0xff]
    %v242 = vld [vmem:[#allocation7 + $0x78] sm:$0xff]
    %v243 = vld [vmem:[#allocation7 + $0x80] sm:$0xff]
    %v244 = vld [vmem:[#allocation7 + $0x88] sm:$0xff]
    %v245 = vld [vmem:[#allocation7 + $0x90] sm:$0xff]
    %v246 = vld [vmem:[#allocation7 + $0x98] sm:$0xff]
    %v247 = vld [vmem:[#allocation7 + $0xa0] sm:$0xff]
    %v248 = vld [vmem:[#allocation7 + $0xa8] sm:$0xff]
    %v249 = vld [vmem:[#allocation7 + $0xb0] sm:$0xff]
    %v250 = vld [vmem:[#allocation7 + $0xb8] sm:$0xff]
    %v251 = vld [vmem:[#allocation7 + $0xc0] sm:$0xff]
    %v252 = vld [vmem:[#allocation7 + $0xc8] sm:$0xff]
    %v253 = vld [vmem:[#allocation7 + $0xd0] sm:$0xff]
    %v254 = vld [vmem:[#allocation7 + $0xd8] sm:$0xff]
    %v255 = vld [vmem:[#allocation7 + $0xe0] sm:$0xff]
    %v256 = vld [vmem:[#allocation7 + $0xe8] sm:$0xff]
    %v257 = vld [vmem:[#allocation7 + $0xf0] sm:$0xff]
    %v258 = vld [vmem:[#allocation7 + $0xf8] sm:$0xff]
    %v259 = vld [vmem:[%s4] sm:$0x1]
    %v261 = vlaneseq
    %v262 = vshrl.u32 %v261, 7
    %v263 = vsub.s32 0, %v262
    %v264 = vrot.slane %v259, %v263
    %266 = vmatprep.subr.mxu0 0.0
    %267 = vmatpush1.msra.mxu0 %v227
    %268 = vmatprep.subr.mxu0 0.0
    %269 = vmatpush1.msra.mxu0 %v228
    %270 = vmatprep.subr.mxu0 0.0
    %271 = vmatpush1.msra.mxu0 %v229
    %272 = vmatprep.subr.mxu0 0.0
    %273 = vmatpush1.msra.mxu0 %v230
    %274 = vmatprep.subr.mxu0 0.0
    %275 = vmatpush1.msra.mxu0 %v231
    %276 = vmatprep.subr.mxu0 0.0
    %277 = vmatpush1.msra.mxu0 %v232
    %278 = vmatprep.subr.mxu0 0.0
    %279 = vmatpush1.msra.mxu0 %v233
    %280 = vmatprep.subr.mxu0 0.0
    %281 = vmatpush1.msra.mxu0 %v234
    %282 = vmatprep.subr.mxu0 0.0
    %283 = vmatpush1.msra.mxu0 %v235
    %284 = vmatprep.subr.mxu0 0.0
    %285 = vmatpush1.msra.mxu0 %v236
    %286 = vmatprep.subr.mxu0 0.0
    %287 = vmatpush1.msra.mxu0 %v237
    %288 = vmatprep.subr.mxu0 0.0
    %289 = vmatpush1.msra.mxu0 %v238
    %290 = vmatprep.subr.mxu0 0.0
    %291 = vmatpush1.msra.mxu0 %v239
    %292 = vmatprep.subr.mxu0 0.0
    %293 = vmatpush1.msra.mxu0 %v240
    %294 = vmatprep.subr.mxu0 0.0
    %295 = vmatpush1.msra.mxu0 %v241
    %296 = vmatprep.subr.mxu0 0.0
    %297 = vmatpush1.msra.mxu0 %v242
    %298 = vmatprep.subr.mxu0 0.0
    %299 = vmatpush1.msra.mxu0 %v243
    %300 = vmatprep.subr.mxu0 0.0
    %301 = vmatpush1.msra.mxu0 %v244
    %302 = vmatprep.subr.mxu0 0.0
    %303 = vmatpush1.msra.mxu0 %v245
    %304 = vmatprep.subr.mxu0 0.0
    %305 = vmatpush1.msra.mxu0 %v246
    %306 = vmatprep.subr.mxu0 0.0
    %307 = vmatpush1.msra.mxu0 %v247
    %308 = vmatprep.subr.mxu0 0.0
    %309 = vmatpush1.msra.mxu0 %v248
    %310 = vmatprep.subr.mxu0 0.0
    %311 = vmatpush1.msra.mxu0 %v249
    %312 = vmatprep.subr.mxu0 0.0
    %313 = vmatpush1.msra.mxu0 %v250
    %314 = vmatprep.subr.mxu0 0.0
    %315 = vmatpush1.msra.mxu0 %v251
    %316 = vmatprep.subr.mxu0 0.0
    %317 = vmatpush1.msra.mxu0 %v252
    %318 = vmatprep.subr.mxu0 0.0
    %319 = vmatpush1.msra.mxu0 %v253
    %320 = vmatprep.subr.mxu0 0.0
    %321 = vmatpush1.msra.mxu0 %v254
    %322 = vmatprep.subr.mxu0 0.0
    %323 = vmatpush1.msra.mxu0 %v255
    %324 = vmatprep.subr.mxu0 0.0
    %325 = vmatpush1.msra.mxu0 %v256
    %326 = vmatprep.subr.mxu0 0.0
    %327 = vmatpush1.msra.mxu0 %v257
    %328 = vmatprep.subr.mxu0 0.0
    %329 = vmatpush1.msra.mxu0 %v258
    %330 = vmatprep.mubr.f32.mxu0 %v155
    %331 = vmatmul.mubr.f32.gmra.mrb[0].mxu0 %v153
    %v332 = vpop.f32.mrb[0].mxu0
    %v333 = vadd.f32 %v264, %v332
    %v334 = vpop.f32.mrb[0].mxu0
    %335 = vdwg.mxu0
    %336 = vst [vmem:[#allocation8] sm:$0x3] %v333
    %vm337 = vcmask 123904
    %338 = vst.msk [vmem:[#allocation9] sm:$0x3] %vm337, %v224
    // Predicated region
    $region34: #{tpu_custom_call.1} parent=1 // pred_check
      _
    $region35: #{tpu_custom_call.1} parent=1 // pred_check_branch
      %340 = sbr.rel (0) target = $region37
    $region36: #{tpu_custom_call.1} parent=1 // pred_region
      %s342 = ssub.s32 32, 32
      %343 = vsyncadd [#allocation4], %s342
      %s345 = sshll.u32 [#allocation8], 4
      %s346 = int_to_ptr.vmem [resolvable:$true] %s345
      %348 = dma.vmem_to_hbm [thread:$0]  %s346, 32, %s5, [#allocation4]
    $region37: #{tpu_custom_call.1} parent=1 // pred_fallthru
      _
    // Predicated region
    $region38: #{tpu_custom_call.1} parent=1 // pred_check
      _
    $region39: #{tpu_custom_call.1} parent=1 // pred_check_branch
      %350 = sbr.rel (0) target = $region41
    $region40: #{tpu_custom_call.1} parent=1 // pred_region
      %s352 = ssub.s32 32, 32
      %353 = vsyncadd [#allocation10], %s352
      %s355 = sshll.u32 [#allocation9], 4
      %s356 = int_to_ptr.vmem [resolvable:$true] %s355
      %358 = dma.vmem_to_hbm [thread:$0]  %s356, 32, %s6, [#allocation10]
    $region41: #{tpu_custom_call.1} parent=1 // pred_fallthru
      _
    // Predicated region
    $region42: #{tpu_custom_call.1} parent=1 // pred_check
      _
    $region43: #{tpu_custom_call.1} parent=1 // pred_check_branch
      %360 = sbr.rel (0) target = $region45
    $region44: #{tpu_custom_call.1} parent=1 // pred_region
      %361 = dma.done [#allocation4], 32
    $region45: #{tpu_custom_call.1} parent=1 // pred_fallthru
      _
    // Predicated region
    $region46: #{tpu_custom_call.1} parent=1 // pred_check
      _
    $region47: #{tpu_custom_call.1} parent=1 // pred_check_branch
      %363 = sbr.rel (0) target = $region49
    $region48: #{tpu_custom_call.1} parent=1 // pred_region
      %364 = dma.done [#allocation10], 32
    $region49: #{tpu_custom_call.1} parent=1 // pred_fallthru
      _
    %365 = vsyncpa [#allocation3], 1
    %366 = vsyncpa [#allocation6], 1
    %367 = vsyncpa [#allocation4], 1
    %368 = vsyncpa [#allocation10], 1

</llo_original>
